<compile_context>
chip_gen: v5e
topology: v5e:2x2
jax: 0.10.0
libtpu: 0.0.40
codegen_flags: <defaults>
</compile_context>

<pallas_src>
import jax
import jax.numpy as jnp
from jax.experimental import pallas as pl
from jax.experimental.pallas import tpu as pltpu


def _normalize_kernel(x_ref, p_ref, o_ref):
    # x_ref: (TR, TC) tile of the input in its native dtype
    # p_ref: (TR, 2)  per-row params: [:, 0] = mean, [:, 1] = 1/std
    # o_ref: (TR, TC) output tile
    x = x_ref[...].astype(jnp.float32)      # in-kernel cast (input.type_as(mean))
    m = p_ref[:, 0:1]                       # (TR, 1), broadcast over lanes
    s = p_ref[:, 1:2]                       # (TR, 1)
    o_ref[...] = ((x - m) * s).astype(o_ref.dtype)


def _round_down(v, m):
    return (v // m) * m


def _select_tiles_and_vmem(rows, cols, in_itemsize, out_itemsize):
    """Pick (tr, tc) and a VMEM limit from a generation-aware byte budget."""
    # Per-core VMEM capacity: 64 MiB on v7x, 128 MiB on v5e/v6e.
    vmem_cap = 64 * 1024 * 1024  # conservative fallback
    try:
        vmem_cap = int(pltpu.get_tpu_info().vmem_capacity_bytes)
    except Exception:
        pass
    # Budget ~70% of per-core VMEM for the double-buffered in+out pipeline.
    pipeline_budget = min(int(vmem_cap * 0.70), 96 * 1024 * 1024)

    # Pipeline bytes per block element: 2 buffers x (input + output widths).
    per_elem = 2 * (in_itemsize + out_itemsize)
    max_block_elems = max(pipeline_budget // per_elem, 1024)

    # Target ~6 MiB of f32 per block (~1.5M elems): amortizes the fixed
    # per-step cost on every generation, fits comfortably in the budget.
    target_block_elems = min(max_block_elems, (6 * 1024 * 1024) // 4)

    # For large tensors keep >= 8 blocks so v7x's two TensorCores each get
    # several pipeline steps; no effect for small tensors.
    total = rows * cols
    if total >= 8 * 64 * 1024:
        target_block_elems = min(target_block_elems, max(total // 8, 64 * 1024))

    # ---- lane (column) tile: multiple of 128, or the full extent ----
    if cols % 128 == 0:
        tc = min(cols, 4096)
        while tc > 128 and 8 * tc > target_block_elems:
            tc -= 128
    else:
        tc = cols  # only legal choice when cols is not 128-aligned

    # ---- sublane (row) tile: multiple of 8 (packing-friendly for narrow
    #      dtypes), sized so the pipeline footprint stays inside the budget.
    sub = 8 * max(4 // in_itemsize, 1)      # 8 for f32, 16 for bf16, 32 for int8
    tr_cap = max(target_block_elems // tc, 1)
    if tr_cap >= rows:
        tr = rows                            # full extent is always legal
    else:
        tr = _round_down(tr_cap, sub)
        if tr == 0:
            tr = _round_down(tr_cap, 8)
        if tr == 0:
            tr = min(8, rows)                # hard floor (e.g. huge unaligned cols)

    return tr, tc, pipeline_budget


def normalize(x, mean, std, out_dtype=jnp.float32):
    """x: (N, C, H, W); mean, std: length-C 1-D float arrays."""
    n, c, h, w = x.shape
    rows, cols = n * c, h * w

    # Per-(sample, channel) parameter columns, packed as (rows, 2):
    #   col 0 = mean, col 1 = 1/std  (same op order as the PyTorch module).
    mean_f = jnp.asarray(mean, jnp.float32)
    inv_std_f = jnp.reciprocal(jnp.asarray(std, jnp.float32))
    params = jnp.tile(jnp.stack([mean_f, inv_std_f], axis=-1), (n, 1))  # (N*C, 2)

    x2d = x.reshape(rows, cols)              # native dtype; cast happens in-kernel
    in_itemsize = jnp.dtype(x2d.dtype).itemsize
    out_itemsize = jnp.dtype(out_dtype).itemsize

    tr, tc, vmem_limit = _select_tiles_and_vmem(rows, cols, in_itemsize, out_itemsize)
    grid = (pl.cdiv(rows, tr), pl.cdiv(cols, tc))

    out2d = pl.pallas_call(
        _normalize_kernel,
        out_shape=jax.ShapeDtypeStruct((rows, cols), out_dtype),
        grid_spec=pltpu.PrefetchScalarGridSpec(
            num_scalar_prefetch=0,
            grid=grid,
            in_specs=[
                pl.BlockSpec((tr, tc), lambda i, j: (i, j)),
                pl.BlockSpec((tr, 2), lambda i, j: (i, 0)),
            ],
            out_specs=pl.BlockSpec((tr, tc), lambda i, j: (i, j)),
        ),
        compiler_params=pltpu.CompilerParams(
            dimension_semantics=("parallel", "parallel"),
            vmem_limit_bytes=int(vmem_limit),
        ),
    )(x2d, params)

    return out2d.reshape(n, c, h, w)


if __name__ == "__main__":
    key = jax.random.PRNGKey(0)
    N, C, H, W = 2, 4, 16, 16
    x = jax.random.normal(key, (N, C, H, W), dtype=jnp.float32)

    # Deterministic "buffer" initialization (as __init__ args would provide).
    mean = jnp.array([0.485, 0.456, 0.406, 0.5], dtype=jnp.float32)
    std = jnp.array([0.229, 0.224, 0.225, 0.25], dtype=jnp.float32)

    out = normalize(x, mean, std)
    jax.block_until_ready(out)

    ref = (x - mean.reshape(1, C, 1, 1)) * jnp.reciprocal(std).reshape(1, C, 1, 1)
    assert out.dtype == jnp.float32
    assert jnp.allclose(out, ref, atol=1e-6, rtol=1e-6)

    # Exercise the in-kernel cast path (bf16 input, f32 output).
    x_bf16 = x.astype(jnp.bfloat16)
    out_bf16 = normalize(x_bf16, mean, std)
    jax.block_until_ready(out_bf16)
    ref_bf16 = (x_bf16.astype(jnp.float32) - mean.reshape(1, C, 1, 1)) * \
        jnp.reciprocal(std).reshape(1, C, 1, 1)
    assert out_bf16.dtype == jnp.float32
    assert jnp.allclose(out_bf16, ref_bf16, atol=1e-6, rtol=1e-6)

    print("KERNEL_OK")
</pallas_src>

<mosaic_0001>
module attributes {stable_mosaic.version = 11 : i64} {
  func.func @_normalize_kernel(%arg0: i32, %arg1: i32, %arg2: memref<8x256xf32, #tpu.memory_space<vmem>>, %arg3: memref<8x2xf32, #tpu.memory_space<vmem>>, %arg4: memref<8x256xf32, #tpu.memory_space<vmem>>) attributes {dimension_semantics = [#tpu.dimension_semantics<parallel>, #tpu.dimension_semantics<parallel>], iteration_bounds = array<i64: 1, 1>, scalar_prefetch = 0 : i64, scratch_operands = 0 : i64, tpu.core_type = #tpu.core_type<tc>, window_params = [{transform_indices = @transform_0, window_bounds = array<i64: 8, 256>}, {transform_indices = @transform_1, window_bounds = array<i64: 8, 2>}, {transform_indices = @transform_2, window_bounds = array<i64: 8, 256>}]} {
    %c0 = arith.constant 0 : index
    %c0_0 = arith.constant 0 : index
    %0 = vector.load %arg2[%c0, %c0_0] : memref<8x256xf32, #tpu.memory_space<vmem>>, vector<8x256xf32>
    %c0_1 = arith.constant 0 : index
    %c0_2 = arith.constant 0 : index
    %1 = vector.load %arg3[%c0_1, %c0_2] : memref<8x2xf32, #tpu.memory_space<vmem>>, vector<8x1xf32>
    %c0_3 = arith.constant 0 : index
    %c1 = arith.constant 1 : index
    %2 = vector.load %arg3[%c0_3, %c1] : memref<8x2xf32, #tpu.memory_space<vmem>>, vector<8x1xf32>
    %3 = vector.broadcast %1 : vector<8x1xf32> to vector<8x256xf32>
    %4 = arith.subf %0, %3 : vector<8x256xf32>
    %5 = vector.broadcast %2 : vector<8x1xf32> to vector<8x256xf32>
    %6 = arith.mulf %4, %5 : vector<8x256xf32>
    %c0_4 = arith.constant 0 : index
    %c0_5 = arith.constant 0 : index
    %7 = vector.load %arg4[%c0_4, %c0_5] : memref<8x256xf32, #tpu.memory_space<vmem>>, vector<8x256xf32>
    tpu.vector_store %arg4[%c0_4, %c0_5], %6 {strides = array<i32>} : memref<8x256xf32, #tpu.memory_space<vmem>>, vector<8x256xf32>,
    return
  }
  func.func @transform_0(%arg0: i32, %arg1: i32) -> (i32, i32) {
    %c0_i32 = arith.constant 0 : i32
    return %arg0, %arg1 : i32, i32
  }
  func.func @transform_1(%arg0: i32, %arg1: i32) -> (i32, i32) {
    %c0_i32 = arith.constant 0 : i32
    %c0_i32_0 = arith.constant 0 : i32
    return %arg0, %c0_i32 : i32, i32
  }
  func.func @transform_2(%arg0: i32, %arg1: i32) -> (i32, i32) {
    %c0_i32 = arith.constant 0 : i32
    return %arg0, %arg1 : i32, i32
  }
}

</mosaic_0001>

<llo_original>
// kernel: tpu_custom_call.1
$region0: #{tpu_custom_call.1}
  #allocation0 [shape = 'u32[]', space=smem, size = 0x4, offset = 0x4, fixed_abs, tag = 'smem constant byte address 0x4 - core index']
  #allocation1 [shape = 'u32[72,128]{1,0:T(1,128)}', space=vmem, size = 0x9000, scoped, tag = 'internal scratch']
  %s0 = inlined_call_operand.hbm [shape: f32[8,256], index: 0, kind: input, shape index: {}]
  %s1 = inlined_call_operand.vmem [shape: f32[8,2], index: 1, kind: input, shape index: {}]
  %s2 = inlined_call_operand.hbm [shape: f32[8,256], index: 2, kind: output, shape index: {}]
  %s3 = sld [smem:[#allocation0]]
  $region22: #{tpu_custom_call.1} parent=0
    _
  %s5 = ssub.s32 1, %s3
  %s6 = scalar_select 0, %s5, %s3
  $region1: #{tpu_custom_call.1} parent=0
    #allocation2 [shape = 'u8[8192]{0}', space=vmem, size = 0x2000, scoped, tag = 'input window, operand 0, single buffered']
    #allocation3 [shape = 's32[1]{0}', space=sflag, size = 0x4, scoped, tag = 'scoped memory for tpu_custom_call.1']
    #allocation4 [shape = 's32[1]{0}', space=sflag, size = 0x4, scoped, tag = 'scoped memory for tpu_custom_call.1']
    #allocation5 [shape = 'u8[8192]{0}', space=vmem, size = 0x2000, scoped, tag = 'output window, operand 0, single buffered']
    %7 = vsyncpa [#allocation3], 0
    %8 = vsyncpa [#allocation4], 0
    // Predicated region
    $region2: #{tpu_custom_call.1} parent=1 // pred_check
      _
    $region3: #{tpu_custom_call.1} parent=1 // pred_check_branch
      %10 = sbr.rel (0) target = $region5
    $region4: #{tpu_custom_call.1} parent=1 // pred_region
      %12 = vsyncadd [#allocation3], 0
      %s14 = sshll.u32 %s0, 4
      %s15 = int_to_ptr.hbm [resolvable:$true] %s14
      %s16 = sshll.u32 [#allocation2], 4
      %s17 = int_to_ptr.vmem [resolvable:$true] %s16
      %19 = dma.hbm_to_vmem [thread:$0]  %s15, 256, %s17, [#allocation3]
    $region5: #{tpu_custom_call.1} parent=1 // pred_fallthru
      _
    // Predicated region
    $region6: #{tpu_custom_call.1} parent=1 // pred_check
      _
    $region7: #{tpu_custom_call.1} parent=1 // pred_check_branch
      %21 = sbr.rel (0) target = $region9
    $region8: #{tpu_custom_call.1} parent=1 // pred_region
      _
    $region9: #{tpu_custom_call.1} parent=1 // pred_fallthru
      _
    // Predicated region
    $region10: #{tpu_custom_call.1} parent=1 // pred_check
      _
    $region11: #{tpu_custom_call.1} parent=1 // pred_check_branch
      %23 = sbr.rel (0) target = $region13
    $region12: #{tpu_custom_call.1} parent=1 // pred_region
      %25 = dma.done [#allocation3], 256
    $region13: #{tpu_custom_call.1} parent=1 // pred_fallthru
      _
    %v26 = vld [vmem:[#allocation2] sm:$0xff]
    %v27 = vld [vmem:[#allocation2 + $0x8] sm:$0xff]
    %v28 = vld [vmem:[%s1] sm:$0xff]
    %30 = vset.pattern.permute.xlu0 0
    %31 = vperm.xlu0 %30, %v28
    %v32 = vpop.permute.xlu0 %31
    %v34 = vsub.f32 %v26, %v32
    %v35 = vsub.f32 %v27, %v32
    %36 = vset.pattern.permute.xlu0 1
    %37 = vperm.xlu0 %36, %v28
    %v38 = vpop.permute.xlu0 %37
    %v40 = vmul.f32 %v34, %v38
    %v41 = vmul.f32 %v35, %v38
    %42 = vst [vmem:[#allocation5] sm:$0xff] %v40
    %43 = vst [vmem:[#allocation5 + $0x8] sm:$0xff] %v41
    // Predicated region
    $region14: #{tpu_custom_call.1} parent=1 // pred_check
      _
    $region15: #{tpu_custom_call.1} parent=1 // pred_check_branch
      %45 = sbr.rel (0) target = $region17
    $region16: #{tpu_custom_call.1} parent=1 // pred_region
      %47 = vsyncadd [#allocation4], 0
      %s49 = sshll.u32 [#allocation5], 4
      %s50 = int_to_ptr.vmem [resolvable:$true] %s49
      %s51 = sshll.u32 %s2, 4
      %s52 = int_to_ptr.hbm [resolvable:$true] %s51
      %54 = dma.vmem_to_hbm [thread:$0]  %s50, 256, %s52, [#allocation4]
    $region17: #{tpu_custom_call.1} parent=1 // pred_fallthru
      _
    // Predicated region
    $region18: #{tpu_custom_call.1} parent=1 // pred_check
      _
    $region19: #{tpu_custom_call.1} parent=1 // pred_check_branch
      %56 = sbr.rel (0) target = $region21
    $region20: #{tpu_custom_call.1} parent=1 // pred_region
      %58 = dma.done [#allocation4], 256
    $region21: #{tpu_custom_call.1} parent=1 // pred_fallthru
      _
    %59 = vsyncpa [#allocation3], 1
    %60 = vsyncpa [#allocation4], 1

</llo_original>
